<compile_context>
chip_gen: v5e
topology: v5e:2x2
jax: 0.10.0
libtpu: 0.0.40
codegen_flags: <defaults>
</compile_context>

<pallas_src>
import contextlib

import jax
import jax.numpy as jnp
from jax.experimental import pallas as pl
from jax.experimental.pallas import tpu as pltpu


# 48 MiB scoped VMEM: well under v5e/v6e physical (128 MiB) and v7x physical (64 MiB).
_VMEM_LIMIT_BYTES = 48 * 1024 * 1024


# ----------------------------------------------------------------------------------
# small shape helpers (all static under jit)
# ----------------------------------------------------------------------------------

def _round_up(x, m):
    return (x + m - 1) // m * m


def _largest_tile(dim, candidates=(512, 256, 128)):
    for c in candidates:
        if dim % c == 0:
            return c
    return dim


def _pick_row_tile(m_pad, d_pad, itemsize, n_operands):
    """Largest power-of-two row tile that divides m_pad and keeps the block <= target.

    Target bytes keep (n_operands big arrays) x (2 pipeline buffers) under ~32 MiB so the
    working set fits the 48 MiB scoped-VMEM cap even on v7x.
    """
    per_block = min(6 * 1024 * 1024, (32 * 1024 * 1024) // max(2 * n_operands, 1))
    for cand in (2048, 1024, 512, 256, 128, 64, 32, 16, 8):
        if m_pad % cand == 0 and cand * d_pad * itemsize <= per_block:
            return cand
    return 8


def _flatten_2d(x):
    d = x.shape[-1]
    m = 1
    for s in x.shape[:-1]:
        m *= s
    return x.reshape(m, d), m, d


def _pad_2d(x2, m, d, m_pad, d_pad):
    if m_pad != m or d_pad != d:
        return jnp.pad(x2, ((0, m_pad - m), (0, d_pad - d)))
    return x2


# ----------------------------------------------------------------------------------
# Pallas kernels
# ----------------------------------------------------------------------------------

def _linear_residual_kernel(x_ref, w_ref, b_ref, o_ref, acc_ref):
    """One (tm, tn) tile of o = x + x @ w + b, accumulated over the K grid axis.

    The residual x is folded into the accumulator at k == j (requires tn == tk and a
    square W, guaranteed by the wrapper) — no second x operand is streamed from HBM.
    """
    j = pl.program_id(1)
    k = pl.program_id(2)

    @pl.when(k == 0)
    def _():
        acc_ref[...] = jnp.zeros_like(acc_ref)

    acc_ref[...] += jnp.dot(x_ref[...], w_ref[...], preferred_element_type=jnp.float32)

    @pl.when(k == j)
    def _():
        acc_ref[...] += x_ref[...].astype(jnp.float32)

    @pl.when(k == pl.num_programs(2) - 1)
    def _():
        o_ref[...] = (acc_ref[...] + b_ref[...].astype(jnp.float32)).astype(o_ref.dtype)


def _sub_kernel(a_ref, b_ref, o_ref):
    o_ref[...] = a_ref[...] - b_ref[...]


def _add_kernel(a_ref, b_ref, o_ref):
    o_ref[...] = a_ref[...] + b_ref[...]


def _residual_similarity_kernel(h_ref, o_ref, p_ref, r_ref, dsum_ref, asum_ref):
    """Fused: r = h - o (written out) and lane-dense partial sums of |p - r| and |p|.

    Grid = (outer core axis "parallel", inner "arbitrary"); dsum/asum blocks are indexed
    only by the outer axis, so they stay VMEM-resident accumulators across the inner axis.
    Only per-lane (row-reduced) partials are accumulated per step; the final cross-lane
    reduce happens once in the JAX wrapper.
    """
    i = pl.program_id(1)

    @pl.when(i == 0)
    def _():
        dsum_ref[...] = jnp.zeros_like(dsum_ref)
        asum_ref[...] = jnp.zeros_like(asum_ref)

    r = h_ref[...].astype(jnp.float32) - o_ref[...].astype(jnp.float32)
    p = p_ref[...].astype(jnp.float32)
    dsum_ref[...] += jnp.sum(jnp.abs(p - r), axis=0, keepdims=True).reshape(dsum_ref.shape)
    asum_ref[...] += jnp.sum(jnp.abs(p), axis=0, keepdims=True).reshape(asum_ref.shape)
    r_ref[...] = r.astype(r_ref.dtype)


def _similarity_kernel(t1_ref, t2_ref, dsum_ref, asum_ref):
    i = pl.program_id(1)

    @pl.when(i == 0)
    def _():
        dsum_ref[...] = jnp.zeros_like(dsum_ref)
        asum_ref[...] = jnp.zeros_like(asum_ref)

    t1 = t1_ref[...].astype(jnp.float32)
    t2 = t2_ref[...].astype(jnp.float32)
    dsum_ref[...] += jnp.sum(jnp.abs(t1 - t2), axis=0, keepdims=True).reshape(dsum_ref.shape)
    asum_ref[...] += jnp.sum(jnp.abs(t1), axis=0, keepdims=True).reshape(asum_ref.shape)


# ----------------------------------------------------------------------------------
# Pallas wrappers
# ----------------------------------------------------------------------------------

@jax.jit
def linear_residual(x, w, b):
    """x: [B, S, D], w: [D_pad, D_pad] (pre-padded, any dtype incl. bf16), b: [1, D_pad].

    Returns x + x @ w + b in x.dtype. x is cast to w.dtype for the MXU (bf16 is the fast
    path on all generations); accumulation is f32.
    """
    B, S, D = x.shape
    M = B * S
    D_pad = max(_round_up(D, 128), 128)

    # tn == tk is required for the k == j residual fold.
    tm = min(512, _round_up(M, 8))
    M_pad = _round_up(M, tm)
    tn = _largest_tile(D_pad)
    tk = tn

    x2 = x.reshape(M, D)
    if x2.dtype != w.dtype:
        x2 = x2.astype(w.dtype)
    x2 = _pad_2d(x2, M, D, M_pad, D_pad)

    # Weights/bias are normally pre-padded at init (no per-call pad op); pad here only
    # if a caller hands in raw [D, D] / [1, D] parameters.
    wp = w if w.shape == (D_pad, D_pad) else jnp.pad(
        w, ((0, D_pad - w.shape[0]), (0, D_pad - w.shape[1])))
    bp = b if b.shape == (1, D_pad) else jnp.pad(b, ((0, 0), (0, D_pad - b.shape[1])))

    out = pl.pallas_call(
        _linear_residual_kernel,
        out_shape=jax.ShapeDtypeStruct((M_pad, D_pad), x.dtype),
        grid=(M_pad // tm, D_pad // tn, D_pad // tk),
        in_specs=[
            pl.BlockSpec((tm, tk), lambda i, j, k: (i, k)),   # x (matmul operand + residual fold)
            pl.BlockSpec((tk, tn), lambda i, j, k: (k, j)),   # w
            pl.BlockSpec((1, tn), lambda i, j, k: (0, j)),    # b
        ],
        out_specs=pl.BlockSpec((tm, tn), lambda i, j, k: (i, j)),
        scratch_shapes=[pltpu.VMEM((tm, tn), jnp.float32)],
        compiler_params=pltpu.CompilerParams(
            dimension_semantics=("parallel", "parallel", "arbitrary"),
            vmem_limit_bytes=_VMEM_LIMIT_BYTES,
        ),
    )(x2, wp, bp)

    if M_pad != M or D_pad != D:
        out = out[:M, :D]
    return out.reshape(B, S, D)


def _elementwise(kernel, a, b):
    shape = a.shape
    if b.dtype != a.dtype:
        b = b.astype(a.dtype)
    a2, M, D = _flatten_2d(a)
    b2, _, _ = _flatten_2d(b)

    D_pad = max(_round_up(D, 128), 128)
    M_pad = _round_up(M, 8)
    tr = _pick_row_tile(M_pad, D_pad, max(jnp.dtype(a.dtype).itemsize, 4), n_operands=3)
    a2 = _pad_2d(a2, M, D, M_pad, D_pad)
    b2 = _pad_2d(b2, M, D, M_pad, D_pad)

    out = pl.pallas_call(
        kernel,
        out_shape=jax.ShapeDtypeStruct((M_pad, D_pad), a.dtype),
        grid=(M_pad // tr,),
        in_specs=[
            pl.BlockSpec((tr, D_pad), lambda i: (i, 0)),
            pl.BlockSpec((tr, D_pad), lambda i: (i, 0)),
        ],
        out_specs=pl.BlockSpec((tr, D_pad), lambda i: (i, 0)),
        compiler_params=pltpu.CompilerParams(
            dimension_semantics=("parallel",),
            vmem_limit_bytes=_VMEM_LIMIT_BYTES,
        ),
    )(a2, b2)

    if M_pad != M or D_pad != D:
        out = out[:M, :D]
    return out.reshape(shape)


@jax.jit
def residual_sub(a, b):
    return _elementwise(_sub_kernel, a, b)


@jax.jit
def residual_add(a, b):
    # TODO(synk): input_output_aliases={1: 0} + donate_argnums would save the output
    # allocation, but donation conflicts with the speculative dispatch on the hit path
    # (the donated buffer is still needed on a miss), and aliasing a non-donated jit
    # parameter forces a defensive copy — net negative, so it is intentionally skipped.
    return _elementwise(_add_kernel, a, b)


def _reduction_layout(M, D, itemsize, n_operands):
    D_pad = max(_round_up(D, 128), 128)
    M_pad = _round_up(M, 8)
    tr = _pick_row_tile(M_pad, D_pad, itemsize, n_operands=n_operands)
    n_blocks = M_pad // tr
    n_outer = 2 if (n_blocks >= 2 and n_blocks % 2 == 0) else 1  # v7x: one per TensorCore
    n_inner = n_blocks // n_outer
    return D_pad, M_pad, tr, n_outer, n_inner


@jax.jit
def residual_and_similarity(hidden, original, prev_residual):
    """Fused: residual = hidden - original, and diff_ratio = sum|prev-res| / sum|prev|.

    One pass over the three operands; the cache decision is a single scalar.
    """
    shape = hidden.shape
    h2, M, D = _flatten_2d(hidden)
    o2, _, _ = _flatten_2d(original)
    p2, _, _ = _flatten_2d(prev_residual)

    D_pad, M_pad, tr, n_outer, n_inner = _reduction_layout(
        M, D, max(jnp.dtype(hidden.dtype).itemsize, 4), n_operands=4)
    h2 = _pad_2d(h2, M, D, M_pad, D_pad)
    o2 = _pad_2d(o2, M, D, M_pad, D_pad)
    p2 = _pad_2d(p2, M, D, M_pad, D_pad)

    row_map = lambda c, i, n=n_inner: (c * n + i, 0)
    sum_map = lambda c, i: (c, 0, 0)

    res, dsum, asum = pl.pallas_call(
        _residual_similarity_kernel,
        out_shape=(
            jax.ShapeDtypeStruct((M_pad, D_pad), hidden.dtype),
            jax.ShapeDtypeStruct((n_outer, 1, D_pad), jnp.float32),
            jax.ShapeDtypeStruct((n_outer, 1, D_pad), jnp.float32),
        ),
        grid=(n_outer, n_inner),
        in_specs=[
            pl.BlockSpec((tr, D_pad), row_map),
            pl.BlockSpec((tr, D_pad), row_map),
            pl.BlockSpec((tr, D_pad), row_map),
        ],
        out_specs=(
            pl.BlockSpec((tr, D_pad), row_map),
            pl.BlockSpec((1, 1, D_pad), sum_map),
            pl.BlockSpec((1, 1, D_pad), sum_map),
        ),
        compiler_params=pltpu.CompilerParams(
            dimension_semantics=("parallel", "arbitrary"),
            vmem_limit_bytes=_VMEM_LIMIT_BYTES,
        ),
    )(h2, o2, p2)

    if M_pad != M or D_pad != D:
        res = res[:M, :D]
    # mean/mean ratio: the /numel cancels (zero padding adds nothing to either sum);
    # eps keeps an all-zero previous residual finite (huge ratio -> cache miss, same
    # behaviour as PyTorch's inf/NaN comparison).
    ratio = jnp.sum(dsum) / (jnp.sum(asum) + jnp.float32(1e-12))
    return res.reshape(shape), ratio


@jax.jit
def similarity_ratio(t1, t2):
    """Device-side mean(|t1-t2|)/mean(|t1|) (single scalar result)."""
    a2, M, D = _flatten_2d(t1)
    b2, _, _ = _flatten_2d(t2)

    D_pad, M_pad, tr, n_outer, n_inner = _reduction_layout(
        M, D, max(jnp.dtype(t1.dtype).itemsize, 4), n_operands=2)
    a2 = _pad_2d(a2, M, D, M_pad, D_pad)
    b2 = _pad_2d(b2, M, D, M_pad, D_pad)

    row_map = lambda c, i, n=n_inner: (c * n + i, 0)
    sum_map = lambda c, i: (c, 0, 0)

    dsum, asum = pl.pallas_call(
        _similarity_kernel,
        out_shape=(
            jax.ShapeDtypeStruct((n_outer, 1, D_pad), jnp.float32),
            jax.ShapeDtypeStruct((n_outer, 1, D_pad), jnp.float32),
        ),
        grid=(n_outer, n_inner),
        in_specs=[
            pl.BlockSpec((tr, D_pad), row_map),
            pl.BlockSpec((tr, D_pad), row_map),
        ],
        out_specs=(
            pl.BlockSpec((1, 1, D_pad), sum_map),
            pl.BlockSpec((1, 1, D_pad), sum_map),
        ),
        compiler_params=pltpu.CompilerParams(
            dimension_semantics=("parallel", "arbitrary"),
            vmem_limit_bytes=_VMEM_LIMIT_BYTES,
        ),
    )(a2, b2)
    return jnp.sum(dsum) / (jnp.sum(asum) + jnp.float32(1e-12))


# ----------------------------------------------------------------------------------
# Cache-context machinery (host-side, mirrors the @torch.compiler.disable() code)
# ----------------------------------------------------------------------------------

_current_cache_context = None


class CacheContext:
    def __init__(self):
        self.buffers = {}

    def get_buffer(self, name):
        return self.buffers.get(name, None)

    def set_buffer(self, name, buffer):
        self.buffers[name] = buffer


@contextlib.contextmanager
def cache_context(ctx):
    global _current_cache_context
    old = _current_cache_context
    _current_cache_context = ctx
    try:
        yield
    finally:
        _current_cache_context = old


def get_current_cache_context():
    return _current_cache_context


def get_buffer(name):
    ctx = get_current_cache_context()
    assert ctx is not None, "cache_context must be set before"
    return ctx.get_buffer(name)


def set_buffer(name, buffer):
    ctx = get_current_cache_context()
    assert ctx is not None, "cache_context must be set before"
    ctx.set_buffer(name, buffer)


def are_two_tensors_similar(t1, t2, *, threshold):
    if t1.shape != t2.shape:
        return False
    return bool(float(jax.device_get(similarity_ratio(t1, t2))) < threshold)


def get_can_use_cache(first_hidden_states_residual, threshold, parallelized=False):
    prev = get_buffer("first_hidden_states_residual")
    return prev is not None and are_two_tensors_similar(
        prev, first_hidden_states_residual, threshold=threshold
    )


def apply_prev_hidden_states_residual(hidden_states, encoder_hidden_states=None):
    hidden_states_residual = get_buffer("hidden_states_residual")
    assert hidden_states_residual is not None, "hidden_states_residual must be set before"
    hidden_states = residual_add(hidden_states_residual, hidden_states)
    if encoder_hidden_states is None:
        return hidden_states
    encoder_hidden_states_residual = get_buffer("encoder_hidden_states_residual")
    if encoder_hidden_states_residual is None:
        encoder_hidden_states = None
    else:
        encoder_hidden_states = residual_add(
            encoder_hidden_states_residual, encoder_hidden_states
        )
    return hidden_states, encoder_hidden_states


# ----------------------------------------------------------------------------------
# Synthetic dual-stream transformer block (parameters initialized deterministically)
# ----------------------------------------------------------------------------------

class DualStreamBlock:
    """block(hidden, encoder) -> (hidden', encoder'); each stream = x + x @ W + b.

    Weights are stored PRE-PADDED to the lane-dense width and in `param_dtype`
    (bf16 by default: the MXU fast path on v5e/v6e/v7x). Activations keep their dtype;
    accumulation is f32 inside the kernel.
    """

    def __init__(self, key, hidden_dim, param_dtype=jnp.bfloat16, scale=0.02):
        d_pad = max(_round_up(hidden_dim, 128), 128)
        k1, k2, k3, k4 = jax.random.split(key, 4)

        def make_w(k):
            w = scale * jax.random.normal(k, (hidden_dim, hidden_dim), dtype=jnp.float32)
            w = jnp.pad(w, ((0, d_pad - hidden_dim), (0, d_pad - hidden_dim)))
            return w.astype(param_dtype)

        def make_b(k):
            b = scale * jax.random.normal(k, (1, hidden_dim), dtype=jnp.float32)
            b = jnp.pad(b, ((0, 0), (0, d_pad - hidden_dim)))
            return b.astype(param_dtype)

        self.w_h, self.b_h = make_w(k1), make_b(k2)
        self.w_t, self.b_t = make_w(k3), make_b(k4)

    def __call__(self, hidden_states, encoder_hidden_states):
        h = linear_residual(hidden_states, self.w_h, self.b_h)
        t = linear_residual(encoder_hidden_states, self.w_t, self.b_t)
        return h, t


# ----------------------------------------------------------------------------------
# CachedTransformerBlocks forward (JAX / Pallas version)
# ----------------------------------------------------------------------------------

class CachedTransformerBlocks:
    def __init__(
        self,
        transformer_blocks,
        single_transformer_blocks=None,
        *,
        residual_diff_threshold,
        validate_can_use_cache_function=None,
        return_hidden_states_first=True,
        accept_hidden_states_first=True,
        cat_hidden_states_first=False,
        return_hidden_states_only=False,
    ):
        # TODO(synk): single_transformer_blocks (joint-stream concat path) not modeled here.
        # TODO(synk): a fully device-side hit/miss branch (lax.cond over the remaining
        # blocks) would remove the host round-trip entirely, but requires all blocks to be
        # traceable into one jit; the speculative dispatch below hides most of the sync.
        self.transformer_blocks = transformer_blocks
        self.single_transformer_blocks = single_transformer_blocks
        self.residual_diff_threshold = residual_diff_threshold
        self.validate_can_use_cache_function = validate_can_use_cache_function
        self.return_hidden_states_first = return_hidden_states_first
        self.accept_hidden_states_first = accept_hidden_states_first
        self.cat_hidden_states_first = cat_hidden_states_first
        self.return_hidden_states_only = return_hidden_states_only

    def _run_block(self, block, hidden_states, encoder_hidden_states):
        if self.accept_hidden_states_first:
            out = block(hidden_states, encoder_hidden_states)
        else:
            out = block(encoder_hidden_states, hidden_states)
        if self.return_hidden_states_only:
            return out, encoder_hidden_states
        hidden_states, encoder_hidden_states = out
        if not self.return_hidden_states_first:
            hidden_states, encoder_hidden_states = encoder_hidden_states, hidden_states
        return hidden_states, encoder_hidden_states

    def __call__(self, hidden_states, encoder_hidden_states):
        if self.residual_diff_threshold <= 0.0:
            for block in self.transformer_blocks:
                hidden_states, encoder_hidden_states = self._run_block(
                    block, hidden_states, encoder_hidden_states
                )
            if self.return_hidden_states_only:
                return hidden_states
            return (
                (hidden_states, encoder_hidden_states)
                if self.return_hidden_states_first
                else (encoder_hidden_states, hidden_states)
            )

        original_hidden_states = hidden_states
        hidden_states, encoder_hidden_states = self._run_block(
            self.transformer_blocks[0], hidden_states, encoder_hidden_states
        )

        # Fused residual-sub + similarity reduction (one HBM pass); only one scalar goes
        # to host. The cache-hit residual adds are dispatched speculatively so they overlap
        # the blocking device->host transfer (dropped on a miss).
        spec_hidden = None
        spec_encoder = None
        prev = get_buffer("first_hidden_states_residual")
        if prev is not None and prev.shape == hidden_states.shape:
            first_hidden_states_residual, diff_ratio = residual_and_similarity(
                hidden_states, original_hidden_states, prev
            )
            hs_res = get_buffer("hidden_states_residual")
            if hs_res is not None and hs_res.shape == hidden_states.shape:
                spec_hidden = residual_add(hs_res, hidden_states)
                enc_res = get_buffer("encoder_hidden_states_residual")
                if (
                    encoder_hidden_states is not None
                    and enc_res is not None
                    and enc_res.shape == encoder_hidden_states.shape
                ):
                    spec_encoder = residual_add(enc_res, encoder_hidden_states)
            can_use_cache = bool(
                float(jax.device_get(diff_ratio)) < self.residual_diff_threshold
            )
        else:
            first_hidden_states_residual = residual_sub(
                hidden_states, original_hidden_states
            )
            can_use_cache = False
        del original_hidden_states

        if self.validate_can_use_cache_function is not None:
            can_use_cache = self.validate_can_use_cache_function(can_use_cache)

        if can_use_cache:
            del first_hidden_states_residual
            if spec_hidden is not None:
                hidden_states = spec_hidden
                if encoder_hidden_states is not None:
                    encoder_hidden_states = spec_encoder
            else:
                out = apply_prev_hidden_states_residual(
                    hidden_states, encoder_hidden_states
                )
                if encoder_hidden_states is None:
                    hidden_states = out
                else:
                    hidden_states, encoder_hidden_states = out
        else:
            set_buffer("first_hidden_states_residual", first_hidden_states_residual)
            del first_hidden_states_residual
            (
                hidden_states,
                encoder_hidden_states,
                hidden_states_residual,
                encoder_hidden_states_residual,
            ) = self.call_remaining_transformer_blocks(hidden_states, encoder_hidden_states)
            set_buffer("hidden_states_residual", hidden_states_residual)
            if encoder_hidden_states_residual is not None:
                set_buffer("encoder_hidden_states_residual", encoder_hidden_states_residual)

        if self.return_hidden_states_only:
            return hidden_states
        return (
            (hidden_states, encoder_hidden_states)
            if self.return_hidden_states_first
            else (encoder_hidden_states, hidden_states)
        )

    def call_remaining_transformer_blocks(self, hidden_states, encoder_hidden_states):
        original_hidden_states = hidden_states
        original_encoder_hidden_states = encoder_hidden_states
        for block in self.transformer_blocks[1:]:
            hidden_states, encoder_hidden_states = self._run_block(
                block, hidden_states, encoder_hidden_states
            )
        hidden_states_residual = residual_sub(hidden_states, original_hidden_states)
        if encoder_hidden_states is None:
            encoder_hidden_states_residual = None
        else:
            encoder_hidden_states_residual = residual_sub(
                encoder_hidden_states, original_encoder_hidden_states
            )
        return (
            hidden_states,
            encoder_hidden_states,
            hidden_states_residual,
            encoder_hidden_states_residual,
        )


# ----------------------------------------------------------------------------------
# Demo
# ----------------------------------------------------------------------------------

if __name__ == "__main__":
    key = jax.random.PRNGKey(0)
    B, S_IMG, S_TXT, D = 2, 16, 8, 32
    dtype = jnp.float32

    k_in, k_txt, k_blocks = jax.random.split(key, 3)
    hidden_states = jax.random.normal(k_in, (B, S_IMG, D), dtype=dtype)
    encoder_hidden_states = jax.random.normal(k_txt, (B, S_TXT, D), dtype=dtype)

    block_keys = jax.random.split(k_blocks, 3)
    blocks = [DualStreamBlock(bk, D) for bk in block_keys]

    cached = CachedTransformerBlocks(blocks, residual_diff_threshold=0.1)

    ctx = CacheContext()
    with cache_context(ctx):
        # First call: cache miss -> runs all blocks, populates residual buffers.
        h1, t1 = cached(hidden_states, encoder_hidden_states)
        jax.block_until_ready(h1)
        jax.block_until_ready(t1)
        # Second call with identical input: first-block residual matches -> cache hit,
        # remaining blocks replaced by the cached residual add (speculatively dispatched).
        h2, t2 = cached(hidden_states, encoder_hidden_states)
        jax.block_until_ready(h2)
        jax.block_until_ready(t2)

    assert h1.shape == (B, S_IMG, D) and t1.shape == (B, S_TXT, D)
    assert bool(jnp.all(jnp.isfinite(h1))) and bool(jnp.all(jnp.isfinite(t1)))
    assert bool(jnp.all(jnp.isfinite(h2))) and bool(jnp.all(jnp.isfinite(t2)))
    # Cache-hit path should reproduce the full path (identical inputs -> identical residuals).
    assert bool(jnp.allclose(h1, h2, atol=1e-5)) and bool(jnp.allclose(t1, t2, atol=1e-5))
    # Sanity: the buffers were populated on the first (miss) call.
    assert ctx.get_buffer("first_hidden_states_residual") is not None
    assert ctx.get_buffer("hidden_states_residual") is not None
    print("KERNEL_OK")
</pallas_src>

<mosaic_0001>
module attributes {stable_mosaic.version = 11 : i64} {
  func.func @_linear_residual_kernel(%arg0: i32, %arg1: i32, %arg2: i32, %arg3: memref<32x128xbf16, #tpu.memory_space<vmem>>, %arg4: memref<128x128xbf16, #tpu.memory_space<vmem>>, %arg5: memref<1x128xbf16, #tpu.memory_space<vmem>>, %arg6: memref<32x128xf32, #tpu.memory_space<vmem>>, %arg7: memref<32x128xf32, #tpu.memory_space<vmem>>) attributes {dimension_semantics = [#tpu.dimension_semantics<parallel>, #tpu.dimension_semantics<parallel>, #tpu.dimension_semantics<arbitrary>], iteration_bounds = array<i64: 1, 1, 1>, scalar_prefetch = 0 : i64, scratch_operands = 1 : i64, tpu.core_type = #tpu.core_type<tc>, window_params = [{transform_indices = @transform_0, window_bounds = array<i64: 32, 128>}, {transform_indices = @transform_1, window_bounds = array<i64: 128, 128>}, {transform_indices = @transform_2, window_bounds = array<i64: 1, 128>}, {transform_indices = @transform_3, window_bounds = array<i64: 32, 128>}]} {
    %c0_i32 = arith.constant 0 : i32
    %0 = arith.cmpi eq, %arg2, %c0_i32 : i32
    %1 = arith.extui %0 : i1 to i32
    %c0_i32_0 = arith.constant 0 : i32
    %2 = arith.cmpi ne, %1, %c0_i32_0 : i32
    scf.if %2 {
      %cst_11 = arith.constant 0.000000e+00 : f32
      %15 = vector.broadcast %cst_11 : f32 to vector<32x128xf32>
      %c0_12 = arith.constant 0 : index
      %c0_13 = arith.constant 0 : index
      %16 = vector.load %arg7[%c0_12, %c0_13] : memref<32x128xf32, #tpu.memory_space<vmem>>, vector<32x128xf32>
      tpu.vector_store %arg7[%c0_12, %c0_13], %15 {strides = array<i32>} : memref<32x128xf32, #tpu.memory_space<vmem>>, vector<32x128xf32>,
    } else {
    }
    %c0 = arith.constant 0 : index
    %c0_1 = arith.constant 0 : index
    %3 = vector.load %arg7[%c0, %c0_1] : memref<32x128xf32, #tpu.memory_space<vmem>>, vector<32x128xf32>
    %c0_2 = arith.constant 0 : index
    %c0_3 = arith.constant 0 : index
    %4 = vector.load %arg3[%c0_2, %c0_3] : memref<32x128xbf16, #tpu.memory_space<vmem>>, vector<32x128xbf16>
    %c0_4 = arith.constant 0 : index
    %c0_5 = arith.constant 0 : index
    %5 = vector.load %arg4[%c0_4, %c0_5] : memref<128x128xbf16, #tpu.memory_space<vmem>>, vector<128x128xbf16>
    %cst = arith.constant dense<0.000000e+00> : vector<32x128xf32>
    %6 = tpu.matmul %4, %5, %cst {dimension_numbers = #tpu.dot_dimension_numbers<[1], [0], [0], [1], [0, 0, 1, 1], [], []>} : vector<32x128xbf16>, vector<128x128xbf16>, vector<32x128xf32> -> vector<32x128xf32>
    %7 = arith.addf %3, %6 : vector<32x128xf32>
    %c0_6 = arith.constant 0 : index
    %c0_7 = arith.constant 0 : index
    %8 = vector.load %arg7[%c0_6, %c0_7] : memref<32x128xf32, #tpu.memory_space<vmem>>, vector<32x128xf32>
    tpu.vector_store %arg7[%c0_6, %c0_7], %7 {strides = array<i32>} : memref<32x128xf32, #tpu.memory_space<vmem>>, vector<32x128xf32>,
    %9 = arith.cmpi eq, %arg2, %arg1 : i32
    %10 = arith.extui %9 : i1 to i32
    %c0_i32_8 = arith.constant 0 : i32
    %11 = arith.cmpi ne, %10, %c0_i32_8 : i32
    scf.if %11 {
      %c0_11 = arith.constant 0 : index
      %c0_12 = arith.constant 0 : index
      %15 = vector.load %arg7[%c0_11, %c0_12] : memref<32x128xf32, #tpu.memory_space<vmem>>, vector<32x128xf32>
      %c0_13 = arith.constant 0 : index
      %c0_14 = arith.constant 0 : index
      %16 = vector.load %arg3[%c0_13, %c0_14] : memref<32x128xbf16, #tpu.memory_space<vmem>>, vector<32x128xbf16>
      %17 = arith.extf %16 : vector<32x128xbf16> to vector<32x128xf32>
      %18 = arith.addf %15, %17 : vector<32x128xf32>
      %c0_15 = arith.constant 0 : index
      %c0_16 = arith.constant 0 : index
      %19 = vector.load %arg7[%c0_15, %c0_16] : memref<32x128xf32, #tpu.memory_space<vmem>>, vector<32x128xf32>
      tpu.vector_store %arg7[%c0_15, %c0_16], %18 {strides = array<i32>} : memref<32x128xf32, #tpu.memory_space<vmem>>, vector<32x128xf32>,
    } else {
    }
    %c0_i32_9 = arith.constant 0 : i32
    %12 = arith.cmpi eq, %arg2, %c0_i32_9 : i32
    %13 = arith.extui %12 : i1 to i32
    %c0_i32_10 = arith.constant 0 : i32
    %14 = arith.cmpi ne, %13, %c0_i32_10 : i32
    scf.if %14 {
      %c0_11 = arith.constant 0 : index
      %c0_12 = arith.constant 0 : index
      %15 = vector.load %arg7[%c0_11, %c0_12] : memref<32x128xf32, #tpu.memory_space<vmem>>, vector<32x128xf32>
      %c0_13 = arith.constant 0 : index
      %c0_14 = arith.constant 0 : index
      %16 = vector.load %arg5[%c0_13, %c0_14] : memref<1x128xbf16, #tpu.memory_space<vmem>>, vector<1x128xbf16>
      %17 = arith.extf %16 : vector<1x128xbf16> to vector<1x128xf32>
      %18 = vector.broadcast %17 : vector<1x128xf32> to vector<32x128xf32>
      %19 = arith.addf %15, %18 : vector<32x128xf32>
      %c0_15 = arith.constant 0 : index
      %c0_16 = arith.constant 0 : index
      %20 = vector.load %arg6[%c0_15, %c0_16] : memref<32x128xf32, #tpu.memory_space<vmem>>, vector<32x128xf32>
      tpu.vector_store %arg6[%c0_15, %c0_16], %19 {strides = array<i32>} : memref<32x128xf32, #tpu.memory_space<vmem>>, vector<32x128xf32>,
    } else {
    }
    return
  }
  func.func @transform_0(%arg0: i32, %arg1: i32, %arg2: i32) -> (i32, i32) {
    %c0_i32 = arith.constant 0 : i32
    return %arg0, %arg2 : i32, i32
  }
  func.func @transform_1(%arg0: i32, %arg1: i32, %arg2: i32) -> (i32, i32) {
    %c0_i32 = arith.constant 0 : i32
    return %arg2, %arg1 : i32, i32
  }
  func.func @transform_2(%arg0: i32, %arg1: i32, %arg2: i32) -> (i32, i32) {
    %c0_i32 = arith.constant 0 : i32
    %c0_i32_0 = arith.constant 0 : i32
    return %c0_i32, %arg1 : i32, i32
  }
  func.func @transform_3(%arg0: i32, %arg1: i32, %arg2: i32) -> (i32, i32) {
    %c0_i32 = arith.constant 0 : i32
    return %arg0, %arg1 : i32, i32
  }
}

</mosaic_0001>

<llo_original>
// kernel: linear_residual.1
$region0: #{linear_residual.1}
  #allocation0 [shape = 'u32[]', space=smem, size = 0x4, offset = 0x4, fixed_abs, tag = 'smem constant byte address 0x4 - core index']
  #allocation1 [shape = 'u32[72,128]{1,0:T(1,128)}', space=vmem, size = 0x9000, scoped, tag = 'internal scratch']
  #allocation2 [shape = 'f32[32,128]{1,0:T(8,128)}', space=vmem, size = 0x4000, scoped, tag = 'scratch operand']
  %s0 = inlined_call_operand.vmem [shape: bf16[32,128], index: 0, kind: input, shape index: {}]
  %s1 = inlined_call_operand.vmem [shape: bf16[128,128], index: 1, kind: input, shape index: {}]
  %s2 = inlined_call_operand.vmem [shape: bf16[1,128], index: 2, kind: input, shape index: {}]
  %s3 = inlined_call_operand.hbm [shape: f32[32,128], index: 3, kind: output, shape index: {}]
  %s4 = sld [smem:[#allocation0]]
  $region34: #{linear_residual.1} parent=0
    _
  %s6 = ssub.s32 1, %s4
  %s7 = scalar_select 0, %s6, %s4
  $region1: #{linear_residual.1} parent=0
    #allocation3 [shape = 'u8[16384]{0}', space=vmem, size = 0x4000, scoped, tag = 'output window, operand 0, single buffered']
    #allocation4 [shape = 's32[1]{0}', space=sflag, size = 0x4, scoped, tag = 'scoped memory for linear_residual.1']
    %8 = vsyncpa [#allocation4], 0
    // Predicated region
    $region2: #{linear_residual.1} parent=1 // pred_check
      _
    $region3: #{linear_residual.1} parent=1 // pred_check_branch
      %10 = sbr.rel (0) target = $region5
    $region4: #{linear_residual.1} parent=1 // pred_region
      _
    $region5: #{linear_residual.1} parent=1 // pred_fallthru
      _
    // Predicated region
    $region6: #{linear_residual.1} parent=1 // pred_check
      _
    $region7: #{linear_residual.1} parent=1 // pred_check_branch
      %12 = sbr.rel (0) target = $region9
    $region8: #{linear_residual.1} parent=1 // pred_region
      _
    $region9: #{linear_residual.1} parent=1 // pred_fallthru
      _
    // Predicated region
    $region10: #{linear_residual.1} parent=1 // pred_check
      _
    $region11: #{linear_residual.1} parent=1 // pred_check_branch
      %14 = sbr.rel (0) target = $region13
    $region12: #{linear_residual.1} parent=1 // pred_region
      _
    $region13: #{linear_residual.1} parent=1 // pred_fallthru
      _
    %p15 = scmp.eq.s32.totalorder 0, 0
    // Predicated region
    $region14: #{linear_residual.1} parent=1 // pred_check
      %p16 = pneg %p15
    $region15: #{linear_residual.1} parent=1 // pred_check_branch
      %18 = sbr.rel (%p16) target = $region17
    $region16: #{linear_residual.1} parent=1 // pred_region
      %19 = vst [vmem:[#allocation2] sm:$0xff] 0.0
      %20 = vst [vmem:[#allocation2 + $0x8] sm:$0xff] 0.0
      %21 = vst [vmem:[#allocation2 + $0x10] sm:$0xff] 0.0
      %22 = vst [vmem:[#allocation2 + $0x18] sm:$0xff] 0.0
    $region17: #{linear_residual.1} parent=1 // pred_fallthru
      _
    %v23 = vld [vmem:[#allocation2] sm:$0xff]
    %v24 = vld [vmem:[#allocation2 + $0x8] sm:$0xff]
    %v25 = vld [vmem:[#allocation2 + $0x10] sm:$0xff]
    %v26 = vld [vmem:[#allocation2 + $0x18] sm:$0xff]
    %v27 = vld [vmem:[%s0] sm:$0xf]
    %v28 = vld [vmem:[%s0 + $0x4] sm:$0xf]
    %v29 = vld [vmem:[%s0 + $0x8] sm:$0xf]
    %v30 = vld [vmem:[%s0 + $0xc] sm:$0xf]
    %v31 = vld [vmem:[%s1] sm:$0xf]
    %v32 = vld [vmem:[%s1 + $0x4] sm:$0xf]
    %v33 = vld [vmem:[%s1 + $0x8] sm:$0xf]
    %v34 = vld [vmem:[%s1 + $0xc] sm:$0xf]
    %v35 = vld [vmem:[%s1 + $0x10] sm:$0xf]
    %v36 = vld [vmem:[%s1 + $0x14] sm:$0xf]
    %v37 = vld [vmem:[%s1 + $0x18] sm:$0xf]
    %v38 = vld [vmem:[%s1 + $0x1c] sm:$0xf]
    %v39 = vld [vmem:[%s1 + $0x20] sm:$0xf]
    %v40 = vld [vmem:[%s1 + $0x24] sm:$0xf]
    %v41 = vld [vmem:[%s1 + $0x28] sm:$0xf]
    %v42 = vld [vmem:[%s1 + $0x2c] sm:$0xf]
    %v43 = vld [vmem:[%s1 + $0x30] sm:$0xf]
    %v44 = vld [vmem:[%s1 + $0x34] sm:$0xf]
    %v45 = vld [vmem:[%s1 + $0x38] sm:$0xf]
    %v46 = vld [vmem:[%s1 + $0x3c] sm:$0xf]
    %v51 = vunpack.c.l.b16 %v27
    %v52 = vunpack.c.l.b16 %v28
    %v53 = vunpack.c.l.b16 %v29
    %v54 = vunpack.c.l.b16 %v30
    %v55 = vpack.c.b16 %v52, %v51
    %v56 = vpack.c.b16 %v54, %v53
    %v75 = vunpack.c.l.b16 %v31
    %v76 = vunpack.c.l.b16 %v32
    %v77 = vunpack.c.l.b16 %v33
    %v78 = vunpack.c.l.b16 %v34
    %v79 = vunpack.c.l.b16 %v35
    %v80 = vunpack.c.l.b16 %v36
    %v81 = vunpack.c.l.b16 %v37
    %v82 = vunpack.c.l.b16 %v38
    %v83 = vunpack.c.l.b16 %v39
    %v84 = vunpack.c.l.b16 %v40
    %v85 = vunpack.c.l.b16 %v41
    %v86 = vunpack.c.l.b16 %v42
    %v87 = vunpack.c.l.b16 %v43
    %v88 = vunpack.c.l.b16 %v44
    %v89 = vunpack.c.l.b16 %v45
    %v90 = vunpack.c.l.b16 %v46
    %v91 = vpack.c.b16 %v76, %v75
    %v92 = vpack.c.b16 %v78, %v77
    %v93 = vpack.c.b16 %v80, %v79
    %v94 = vpack.c.b16 %v82, %v81
    %v95 = vpack.c.b16 %v84, %v83
    %v96 = vpack.c.b16 %v86, %v85
    %v97 = vpack.c.b16 %v88, %v87
    %v98 = vpack.c.b16 %v90, %v89
    %107 = vmatpush.bf16.msra.mxu0 %v98
    %108 = vmatpush.bf16.msra.mxu0 %v97
    %109 = vmatpush.bf16.msra.mxu0 %v96
    %110 = vmatpush.bf16.msra.mxu0 %v95
    %111 = vmatpush.bf16.msra.mxu0 %v94
    %112 = vmatpush.bf16.msra.mxu0 %v93
    %113 = vmatpush.bf16.msra.mxu0 %v92
    %114 = vmatpush.bf16.msra.mxu0 %v91
    %115 = vmatmul.bf16.gmra.mxu0 %v55
    %v116 = vpop.f32.mrf.mxu0
    %v117 = vadd.f32 0.0, %v116
    %v118 = vpop.f32.mrf.mxu0
    %v119 = vadd.f32 0.0, %v118
    %120 = vmatmul.bf16.gmra.mxu0 %v56
    %v121 = vpop.f32.mrf.mxu0
    %v122 = vadd.f32 0.0, %v121
    %v123 = vpop.f32.mrf.mxu0
    %v124 = vadd.f32 0.0, %v123
    %125 = vdwg.mxu0
    %v126 = vadd.f32 %v23, %v117
    %v127 = vadd.f32 %v24, %v119
    %v128 = vadd.f32 %v25, %v122
    %v129 = vadd.f32 %v26, %v124
    %130 = vst [vmem:[#allocation2] sm:$0xff] %v126
    %131 = vst [vmem:[#allocation2 + $0x8] sm:$0xff] %v127
    %132 = vst [vmem:[#allocation2 + $0x10] sm:$0xff] %v128
    %133 = vst [vmem:[#allocation2 + $0x18] sm:$0xff] %v129
    %p134 = scmp.eq.s32.totalorder 0, 0
    // Predicated region
    $region18: #{linear_residual.1} parent=1 // pred_check
      %p135 = pneg %p134
    $region19: #{linear_residual.1} parent=1 // pred_check_branch
      %137 = sbr.rel (%p135) target = $region21
    $region20: #{linear_residual.1} parent=1 // pred_region
      %v138 = vld [vmem:[#allocation2] sm:$0xff]
      %v139 = vld [vmem:[#allocation2 + $0x8] sm:$0xff]
      %v140 = vld [vmem:[#allocation2 + $0x10] sm:$0xff]
      %v141 = vld [vmem:[#allocation2 + $0x18] sm:$0xff]
      %v142 = vld [vmem:[%s0] sm:$0xf]
      %v143 = vld [vmem:[%s0 + $0x4] sm:$0xf]
      %v144 = vld [vmem:[%s0 + $0x8] sm:$0xf]
      %v145 = vld [vmem:[%s0 + $0xc] sm:$0xf]
      %v146 = vunpack.c.l.bf16 %v142
      %v147 = vunpack.c.l.bf16 %v143
      %v148 = vunpack.c.l.bf16 %v144
      %v149 = vunpack.c.l.bf16 %v145
      %v150 = vadd.f32 %v138, %v146
      %v151 = vadd.f32 %v139, %v147
      %v152 = vadd.f32 %v140, %v148
      %v153 = vadd.f32 %v141, %v149
      %154 = vst [vmem:[#allocation2] sm:$0xff] %v150
      %155 = vst [vmem:[#allocation2 + $0x8] sm:$0xff] %v151
      %156 = vst [vmem:[#allocation2 + $0x10] sm:$0xff] %v152
      %157 = vst [vmem:[#allocation2 + $0x18] sm:$0xff] %v153
    $region21: #{linear_residual.1} parent=1 // pred_fallthru
      _
    // Predicated region
    $region22: #{linear_residual.1} parent=1 // pred_check
      %p158 = pneg %p15
    $region23: #{linear_residual.1} parent=1 // pred_check_branch
      %160 = sbr.rel (%p158) target = $region25
    $region24: #{linear_residual.1} parent=1 // pred_region
      %v161 = vld [vmem:[#allocation2] sm:$0xff]
      %v162 = vld [vmem:[#allocation2 + $0x8] sm:$0xff]
      %v163 = vld [vmem:[#allocation2 + $0x10] sm:$0xff]
      %v164 = vld [vmem:[#allocation2 + $0x18] sm:$0xff]
      %v165 = vld [vmem:[%s2] sm:$0x1]
      %v166 = vunpack.c.l.bf16 %v165
      %v167 = vperm.slane %v166, 0
      %v168 = vadd.f32 %v161, %v167
      %v169 = vadd.f32 %v162, %v167
      %v170 = vadd.f32 %v163, %v167
      %v171 = vadd.f32 %v164, %v167
      %172 = vst [vmem:[#allocation3] sm:$0xff] %v168
      %173 = vst [vmem:[#allocation3 + $0x8] sm:$0xff] %v169
      %174 = vst [vmem:[#allocation3 + $0x10] sm:$0xff] %v170
      %175 = vst [vmem:[#allocation3 + $0x18] sm:$0xff] %v171
    $region25: #{linear_residual.1} parent=1 // pred_fallthru
      _
    // Predicated region
    $region26: #{linear_residual.1} parent=1 // pred_check
      _
    $region27: #{linear_residual.1} parent=1 // pred_check_branch
      %177 = sbr.rel (0) target = $region29
    $region28: #{linear_residual.1} parent=1 // pred_region
      %179 = vsyncadd [#allocation4], 0
      %s180 = sshll.u32 [#allocation3], 4
      %s181 = int_to_ptr.vmem [resolvable:$true] %s180
      %s182 = sshll.u32 %s3, 4
      %s183 = int_to_ptr.hbm [resolvable:$true] %s182
      %188 = dma.vmem_to_hbm [thread:$0]  %s181, 512, %s183, [#allocation4], 128, 128, 8
    $region29: #{linear_residual.1} parent=1 // pred_fallthru
      _
    // Predicated region
    $region30: #{linear_residual.1} parent=1 // pred_check
      _
    $region31: #{linear_residual.1} parent=1 // pred_check_branch
      %190 = sbr.rel (0) target = $region33
    $region32: #{linear_residual.1} parent=1 // pred_region
      %192 = dma.done [#allocation4], 512
    $region33: #{linear_residual.1} parent=1 // pred_fallthru
      _
    %193 = vsyncpa [#allocation4], 1

</llo_original>
